<compile_context>
chip_gen: v7x
topology: tpu7x:2x2x1
jax: 0.10.0
libtpu: 0.0.40
codegen_flags: <defaults>
</compile_context>

<pallas_src>
import jax
import jax.numpy as jnp
from jax import lax
from jax.experimental import pallas as pl
from jax.experimental.pallas import tpu as pltpu


def _round_up(x, m):
    return (x + m - 1) // m * m


def _take_gather_kernel(ids_ref, table_ref, out_ref):
    """ids_ref: (B, 1) int32; table_ref: (Vp, Ep) VMEM-resident; out_ref: (B, Ep)."""
    ids = ids_ref[...][:, 0]                              # (B,) int32
    gathered = jnp.take(table_ref[...], ids, axis=0, mode="clip")
    out_ref[...] = gathered.astype(out_ref.dtype)


def _onehot_matmul_kernel(ids_ref, table_ref, out_ref):
    """Fallback gather via a 0/1 one-hot MXU matmul (bit-exact for 0/1 weights)."""
    ids = ids_ref[...]                                    # (B, 1) int32
    b = out_ref.shape[0]
    v = table_ref.shape[0]
    col = lax.broadcasted_iota(jnp.int32, (b, v), 1)      # (B, V)
    onehot = (col == ids).astype(table_ref.dtype)         # broadcast (B,1)->(B,V)
    out_ref[...] = jnp.dot(
        onehot, table_ref[...], preferred_element_type=jnp.float32
    ).astype(out_ref.dtype)


def node_embeddings_forward(vocab_ids, emb_table, block_rows=512):
    """vocab_ids: int [N, 1]; emb_table: float [vocab_size, emb_size]."""
    n = vocab_ids.shape[0]
    vocab_size, emb_size = emb_table.shape
    itemsize = jnp.dtype(emb_table.dtype).itemsize

    # Lane-dense layout: pad embedding dim to a multiple of 128 lanes, rows of
    # the table to a sublane multiple.  Padding is zeros and is never selected.
    e_pad = _round_up(emb_size, 128)
    v_pad = _round_up(vocab_size, 8)
    table = emb_table
    if (v_pad, e_pad) != (vocab_size, emb_size):
        table = jnp.pad(emb_table, ((0, v_pad - vocab_size), (0, e_pad - emb_size)))

    # Rows per grid step, chosen to minimize tail padding instead of rounding
    # N up to a full block (N=300 -> n_pad=304 with 2 steps, not 512).
    if n <= block_rows:
        g = 1
        b = _round_up(n, 8)
    else:
        g = -(-n // block_rows)
        b = _round_up(-(-n // g), 8)
    n_pad = g * b

    flat_ids = vocab_ids.reshape(-1).astype(jnp.int32)
    if n_pad != n:
        flat_ids = jnp.pad(flat_ids, (0, n_pad - n))      # pad with valid id 0
    ids_2d = flat_ids.reshape(n_pad, 1)

    table_bytes = v_pad * e_pad * itemsize
    out_bytes = n_pad * e_pad * itemsize
    # VMEM budget: resident table (x2 in case the conservative blocked-spec
    # fallback double-buffers it), double-buffered ids/out tiles, plus slack
    # for compiler-internal scratch and the fallback's one-hot intermediate.
    vmem_need = (
        2 * table_bytes
        + 2 * (b * 4)
        + 2 * (b * e_pad * itemsize)
        + b * v_pad * 4
        + (4 << 20)
    )
    # No artificial 32 MiB floor; cap well under v7x's 64 MiB per TensorCore.
    vmem_limit = int(min(max(vmem_need, 16 * 1024 * 1024), 48 * 1024 * 1024))

    # Memory-bound op: ~0 flops, table + ids + output bytes.
    cost = pl.CostEstimate(
        flops=0,
        transcendentals=0,
        bytes_accessed=table_bytes + n_pad * 4 + out_bytes,
    )

    ids_spec = pl.BlockSpec((b, 1), lambda i: (i, 0))
    out_spec = pl.BlockSpec((b, e_pad), lambda i: (i, 0))
    # Preferred: whole table resident in VMEM, single-buffered (loaded once).
    table_spec_resident = pl.BlockSpec(memory_space=pltpu.MemorySpace.VMEM)
    # Conservative alternative: whole-table block with a constant index map
    # (auto-pipelined; may double-buffer the table).
    table_spec_blocked = pl.BlockSpec((v_pad, e_pad), lambda i: (0, 0))

    def run(kernel, table_spec):
        return pl.pallas_call(
            kernel,
            out_shape=jax.ShapeDtypeStruct((n_pad, e_pad), emb_table.dtype),
            grid=(g,),
            in_specs=[ids_spec, table_spec],
            out_specs=out_spec,
            compiler_params=pltpu.CompilerParams(
                dimension_semantics=("parallel",),        # disjoint output blocks
                vmem_limit_bytes=vmem_limit,
            ),
            cost_estimate=cost,
        )(ids_2d, table)

    # Preference order: vectorized VMEM gather first; one-hot matmul only if
    # the dynamic-gather lowering is unavailable in this jax/libtpu version.
    attempts = (
        (_take_gather_kernel, table_spec_resident),
        (_take_gather_kernel, table_spec_blocked),
        (_onehot_matmul_kernel, table_spec_resident),
        (_onehot_matmul_kernel, table_spec_blocked),      # previously validated path
    )
    out = None
    last_err = None
    for kernel, table_spec in attempts:
        try:
            out = run(kernel, table_spec)
            break
        except Exception as err:                          # lowering support varies
            last_err = err
    if out is None:
        raise last_err

    # nn.Embedding on a <N, 1> index tensor returns <N, 1, emb_size>.
    return out[:n, :emb_size].reshape(n, 1, emb_size)


if __name__ == "__main__":
    # Synthetic config: inst2vec_embeddings == 'random' branch of __init__.
    vocab_size = 64
    emb_size = 32
    n = 8

    key = jax.random.PRNGKey(0)
    k_emb, k_ids = jax.random.split(key)
    # Deterministic "random" embedding table (stand-in for nn.Embedding init).
    emb_table = jax.random.normal(k_emb, (vocab_size, emb_size), dtype=jnp.float32)
    vocab_ids = jax.random.randint(k_ids, (n, 1), 0, vocab_size, dtype=jnp.int32)

    node_states = node_embeddings_forward(vocab_ids, emb_table)
    node_states = jax.block_until_ready(node_states)

    # Cross-check against a plain-JAX embedding lookup.
    ref = jnp.take(emb_table, vocab_ids.reshape(-1), axis=0).reshape(n, 1, emb_size)
    assert node_states.shape == (n, 1, emb_size), node_states.shape
    assert node_states.dtype == jnp.float32
    assert jnp.allclose(node_states, ref), "mismatch vs reference gather"

    print("KERNEL_OK")
</pallas_src>

<mosaic_0001>
module attributes {stable_mosaic.version = 11 : i64} {
  func.func @_onehot_matmul_kernel(%arg0: i32, %arg1: memref<8x1xi32, #tpu.memory_space<vmem>>, %arg2: memref<64x128xf32, #tpu.memory_space<vmem>>, %arg3: memref<8x128xf32, #tpu.memory_space<vmem>>) attributes {dimension_semantics = [#tpu.dimension_semantics<parallel>], iteration_bounds = array<i64: 1>, scalar_prefetch = 0 : i64, scratch_operands = 0 : i64, tpu.core_type = #tpu.core_type<tc>, window_params = [{transform_indices = @transform_0, window_bounds = array<i64: 8, 1>}, {pipeline_mode = #tpu.pipeline_mode<synchronous>, transform_indices = @transform_1, window_bounds = array<i64: 64, 128>}, {transform_indices = @transform_2, window_bounds = array<i64: 8, 128>}]} {
    %c0 = arith.constant 0 : index
    %c0_0 = arith.constant 0 : index
    %0 = vector.load %arg1[%c0, %c0_0] : memref<8x1xi32, #tpu.memory_space<vmem>>, vector<8x1xi32>
    %1 = tpu.iota {dimensions = array<i32: 1>} : vector<8x64xi32>
    %2 = vector.broadcast %0 : vector<8x1xi32> to vector<8x64xi32>
    %3 = arith.cmpi eq, %1, %2 : vector<8x64xi32>
    %4 = arith.extui %3 : vector<8x64xi1> to vector<8x64xi32>
    %5 = arith.sitofp %4 : vector<8x64xi32> to vector<8x64xf32>
    %c0_1 = arith.constant 0 : index
    %c0_2 = arith.constant 0 : index
    %6 = vector.load %arg2[%c0_1, %c0_2] : memref<64x128xf32, #tpu.memory_space<vmem>>, vector<64x128xf32>
    %cst = arith.constant dense<0.000000e+00> : vector<8x128xf32>
    %7 = tpu.matmul %5, %6, %cst {dimension_numbers = #tpu.dot_dimension_numbers<[1], [0], [0], [1], [0, 0, 1, 1], [], []>} : vector<8x64xf32>, vector<64x128xf32>, vector<8x128xf32> -> vector<8x128xf32>
    %c0_3 = arith.constant 0 : index
    %c0_4 = arith.constant 0 : index
    %8 = vector.load %arg3[%c0_3, %c0_4] : memref<8x128xf32, #tpu.memory_space<vmem>>, vector<8x128xf32>
    tpu.vector_store %arg3[%c0_3, %c0_4], %7 {strides = array<i32>} : memref<8x128xf32, #tpu.memory_space<vmem>>, vector<8x128xf32>,
    return
  }
  func.func @transform_0(%arg0: i32) -> (i32, i32) {
    %c0_i32 = arith.constant 0 : i32
    %c0_i32_0 = arith.constant 0 : i32
    return %arg0, %c0_i32 : i32, i32
  }
  func.func @transform_1(%arg0: i32) -> (i32, i32) {
    %c0_i32 = arith.constant 0 : i32
    %c0_i32_0 = arith.constant 0 : i32
    %c0_i32_1 = arith.constant 0 : i32
    return %c0_i32, %c0_i32_0 : i32, i32
  }
  func.func @transform_2(%arg0: i32) -> (i32, i32) {
    %c0_i32 = arith.constant 0 : i32
    %c0_i32_0 = arith.constant 0 : i32
    return %arg0, %c0_i32 : i32, i32
  }
}

module attributes {stable_mosaic.version = 11 : i64} {
  func.func @_onehot_matmul_kernel(%arg0: i32, %arg1: memref<8x1xi32, #tpu.memory_space<vmem>>, %arg2: memref<64x128xf32, #tpu.memory_space<vmem>>, %arg3: memref<8x128xf32, #tpu.memory_space<vmem>>) attributes {dimension_semantics = [#tpu.dimension_semantics<parallel>], iteration_bounds = array<i64: 1>, scalar_prefetch = 0 : i64, scratch_operands = 0 : i64, tpu.core_type = #tpu.core_type<tc>, window_params = [{transform_indices = @transform_0, window_bounds = array<i64: 8, 1>}, {pipeline_mode = #tpu.pipeline_mode<synchronous>, transform_indices = @transform_1, window_bounds = array<i64: 64, 128>}, {transform_indices = @transform_2, window_bounds = array<i64: 8, 128>}]} {
    %c0 = arith.constant 0 : index
    %c0_0 = arith.constant 0 : index
    %0 = vector.load %arg1[%c0, %c0_0] : memref<8x1xi32, #tpu.memory_space<vmem>>, vector<8x1xi32>
    %1 = tpu.iota {dimensions = array<i32: 1>} : vector<8x64xi32>
    %2 = vector.broadcast %0 : vector<8x1xi32> to vector<8x64xi32>
    %3 = arith.cmpi eq, %1, %2 : vector<8x64xi32>
    %4 = arith.extui %3 : vector<8x64xi1> to vector<8x64xi32>
    %5 = arith.sitofp %4 : vector<8x64xi32> to vector<8x64xf32>
    %c0_1 = arith.constant 0 : index
    %c0_2 = arith.constant 0 : index
    %6 = vector.load %arg2[%c0_1, %c0_2] : memref<64x128xf32, #tpu.memory_space<vmem>>, vector<64x128xf32>
    %cst = arith.constant dense<0.000000e+00> : vector<8x128xf32>
    %7 = tpu.matmul %5, %6, %cst {dimension_numbers = #tpu.dot_dimension_numbers<[1], [0], [0], [1], [0, 0, 1, 1], [], []>} : vector<8x64xf32>, vector<64x128xf32>, vector<8x128xf32> -> vector<8x128xf32>
    %c0_3 = arith.constant 0 : index
    %c0_4 = arith.constant 0 : index
    %8 = vector.load %arg3[%c0_3, %c0_4] : memref<8x128xf32, #tpu.memory_space<vmem>>, vector<8x128xf32>
    tpu.vector_store %arg3[%c0_3, %c0_4], %7 {strides = array<i32>} : memref<8x128xf32, #tpu.memory_space<vmem>>, vector<8x128xf32>,
    return
  }
  func.func @transform_0(%arg0: i32) -> (i32, i32) {
    %c0_i32 = arith.constant 0 : i32
    %c0_i32_0 = arith.constant 0 : i32
    return %arg0, %c0_i32 : i32, i32
  }
  func.func @transform_1(%arg0: i32) -> (i32, i32) {
    %c0_i32 = arith.constant 0 : i32
    %c0_i32_0 = arith.constant 0 : i32
    %c0_i32_1 = arith.constant 0 : i32
    return %c0_i32, %c0_i32_0 : i32, i32
  }
  func.func @transform_2(%arg0: i32) -> (i32, i32) {
    %c0_i32 = arith.constant 0 : i32
    %c0_i32_0 = arith.constant 0 : i32
    return %arg0, %c0_i32 : i32, i32
  }
}

</mosaic_0001>

<llo_original>
// kernel: tpu_custom_call.1
$region0: #{tpu_custom_call.1}
  #allocation0 [shape = 'u32[]', space=smem, size = 0x4, offset = 0x4, fixed_abs, tag = 'smem constant byte address 0x4 - core index']
  #allocation1 [shape = 'u32[144,128]{1,0:T(1,128)}', space=vmem, size = 0x12000, scoped, tag = 'internal scratch']
  %s0 = inlined_call_operand.vmem [shape: s32[8,1], index: 0, kind: input, shape index: {}]
  %s1 = inlined_call_operand.hbm [shape: f32[64,128], index: 1, kind: input, shape index: {}]
  %s2 = inlined_call_operand.hbm [shape: f32[8,128], index: 2, kind: output, shape index: {}]
  %s3 = sld [smem:[#allocation0]]
  $region22: #{tpu_custom_call.1} parent=0
    _
  %s5 = ssub.s32 1, %s3
  %s6 = scalar_select 0, %s5, %s3
  $region1: #{tpu_custom_call.1} parent=0
    #allocation2 [shape = 'u8[32768]{0}', space=vmem, size = 0x8000, scoped, tag = 'input window, operand 1, single buffered']
    #allocation3 [shape = 's32[1]{0}', space=sflag, size = 0x4, scoped, tag = 'scoped memory for tpu_custom_call.1']
    #allocation4 [shape = 's32[1]{0}', space=sflag, size = 0x4, scoped, tag = 'scoped memory for tpu_custom_call.1']
    #allocation5 [shape = 'u8[4096]{0}', space=vmem, size = 0x1000, scoped, tag = 'output window, operand 0, single buffered']
    %7 = vsyncpa [#allocation3], 0
    %8 = vsyncpa [#allocation4], 0
    // Predicated region
    $region2: #{tpu_custom_call.1} parent=1 // pred_check
      _
    $region3: #{tpu_custom_call.1} parent=1 // pred_check_branch
      %10 = sbr.rel (0) target = $region5
    $region4: #{tpu_custom_call.1} parent=1 // pred_region
      _
    $region5: #{tpu_custom_call.1} parent=1 // pred_fallthru
      _
    // Predicated region
    $region6: #{tpu_custom_call.1} parent=1 // pred_check
      _
    $region7: #{tpu_custom_call.1} parent=1 // pred_check_branch
      %12 = sbr.rel (0) target = $region9
    $region8: #{tpu_custom_call.1} parent=1 // pred_region
      %s14 = ssub.s32 1024, 1024
      %15 = vsyncadd [#allocation3], %s14
      %s16 = sshll.u32 [#allocation2], 4
      %s17 = int_to_ptr.vmem [resolvable:$true] %s16
      %22 = dma.hbm_to_vmem [thread:$0]  %s1, 1024, %s17, [#allocation3], 128, 128, 8
    $region9: #{tpu_custom_call.1} parent=1 // pred_fallthru
      _
    // Predicated region
    $region10: #{tpu_custom_call.1} parent=1 // pred_check
      _
    $region11: #{tpu_custom_call.1} parent=1 // pred_check_branch
      %24 = sbr.rel (0) target = $region13
    $region12: #{tpu_custom_call.1} parent=1 // pred_region
      %25 = dma.done [#allocation3], 1024
    $region13: #{tpu_custom_call.1} parent=1 // pred_fallthru
      _
    %v26 = vld [vmem:[%s0] sm:$0xff]
    %v27 = vlaneseq
    %v28 = vand.u32 %v27, 127
    %29 = vset.pattern.permute.xlu0 0
    %30 = vperm.xlu0 %29, %v26
    %v31 = vpop.permute.xlu0 %30
    %vm32 = vcmp.eq.s32.totalorder %v28, %v31
    %v33 = vsel %vm32, 1, 0
    %v34 = vcvt.s32.f32 %v33
    %v35 = vld [vmem:[#allocation2] sm:$0xff]
    %v36 = vld [vmem:[#allocation2 + $0x8] sm:$0xff]
    %v37 = vld [vmem:[#allocation2 + $0x10] sm:$0xff]
    %v38 = vld [vmem:[#allocation2 + $0x18] sm:$0xff]
    %v39 = vld [vmem:[#allocation2 + $0x20] sm:$0xff]
    %v40 = vld [vmem:[#allocation2 + $0x28] sm:$0xff]
    %v41 = vld [vmem:[#allocation2 + $0x30] sm:$0xff]
    %v42 = vld [vmem:[#allocation2 + $0x38] sm:$0xff]
    %vm43 = vcmask 523264
    %v45 = vsel %vm43, %v34, 0
    %47 = vmatprep.subr.mxu0 0.0
    %48 = vmatpush1.msra.mxu0 %v35
    %49 = vmatprep.subr.mxu0 0.0
    %50 = vmatpush1.msra.mxu0 %v36
    %51 = vmatprep.subr.mxu0 0.0
    %52 = vmatpush1.msra.mxu0 %v37
    %53 = vmatprep.subr.mxu0 0.0
    %54 = vmatpush1.msra.mxu0 %v38
    %55 = vmatprep.subr.mxu0 0.0
    %56 = vmatpush1.msra.mxu0 %v39
    %57 = vmatprep.subr.mxu0 0.0
    %58 = vmatpush1.msra.mxu0 %v40
    %59 = vmatprep.subr.mxu0 0.0
    %60 = vmatpush1.msra.mxu0 %v41
    %61 = vmatprep.subr.mxu0 0.0
    %62 = vmatpush1.msra.mxu0 %v42
    %63 = vmatprep.subr.mxu0 0.0
    %64 = vmatpush1.msra.mxu0 0.0
    %65 = vmatprep.subr.mxu0 0.0
    %66 = vmatpush1.msra.mxu0 0.0
    %67 = vmatprep.subr.mxu0 0.0
    %68 = vmatpush1.msra.mxu0 0.0
    %69 = vmatprep.subr.mxu0 0.0
    %70 = vmatpush1.msra.mxu0 0.0
    %71 = vmatprep.subr.mxu0 0.0
    %72 = vmatpush1.msra.mxu0 0.0
    %73 = vmatprep.subr.mxu0 0.0
    %74 = vmatpush1.msra.mxu0 0.0
    %75 = vmatprep.subr.mxu0 0.0
    %76 = vmatpush1.msra.mxu0 0.0
    %77 = vmatprep.subr.mxu0 0.0
    %78 = vmatpush1.msra.mxu0 0.0
    %79 = vmatprep.subr.mxu0 0.0
    %80 = vmatpush1.msra.mxu0 0.0
    %81 = vmatprep.subr.mxu0 0.0
    %82 = vmatpush1.msra.mxu0 0.0
    %83 = vmatprep.subr.mxu0 0.0
    %84 = vmatpush1.msra.mxu0 0.0
    %85 = vmatprep.subr.mxu0 0.0
    %86 = vmatpush1.msra.mxu0 0.0
    %87 = vmatprep.subr.mxu0 0.0
    %88 = vmatpush1.msra.mxu0 0.0
    %89 = vmatprep.subr.mxu0 0.0
    %90 = vmatpush1.msra.mxu0 0.0
    %91 = vmatprep.subr.mxu0 0.0
    %92 = vmatpush1.msra.mxu0 0.0
    %93 = vmatprep.subr.mxu0 0.0
    %94 = vmatpush1.msra.mxu0 0.0
    %95 = vmatprep.subr.mxu0 0.0
    %96 = vmatpush1.msra.mxu0 0.0
    %97 = vmatprep.subr.mxu0 0.0
    %98 = vmatpush1.msra.mxu0 0.0
    %99 = vmatprep.subr.mxu0 0.0
    %100 = vmatpush1.msra.mxu0 0.0
    %101 = vmatprep.subr.mxu0 0.0
    %102 = vmatpush1.msra.mxu0 0.0
    %103 = vmatprep.subr.mxu0 0.0
    %104 = vmatpush1.msra.mxu0 0.0
    %105 = vmatprep.subr.mxu0 0.0
    %106 = vmatpush1.msra.mxu0 0.0
    %107 = vmatprep.subr.mxu0 0.0
    %108 = vmatpush1.msra.mxu0 0.0
    %109 = vmatprep.subr.mxu0 0.0
    %110 = vmatpush1.msra.mxu0 0.0
    %111 = vmatprep.mubr.f32.mxu0 0.0
    %112 = vmatmul.mubr.f32.gmra.mrb[0].mxu0 %v45
    %v113 = vpop.f32.mrb[0].mxu0
    %v114 = vadd.f32 0.0, %v113
    %v115 = vpop.f32.mrb[0].mxu0
    %116 = vdwg.mxu0
    %117 = vst [vmem:[#allocation5] sm:$0xff] %v114
    // Predicated region
    $region14: #{tpu_custom_call.1} parent=1 // pred_check
      _
    $region15: #{tpu_custom_call.1} parent=1 // pred_check_branch
      %119 = sbr.rel (0) target = $region17
    $region16: #{tpu_custom_call.1} parent=1 // pred_region
      %s121 = ssub.s32 128, 128
      %122 = vsyncadd [#allocation4], %s121
      %s124 = sshll.u32 [#allocation5], 4
      %s125 = int_to_ptr.vmem [resolvable:$true] %s124
      %127 = dma.vmem_to_hbm [thread:$0]  %s125, 128, %s2, [#allocation4]
    $region17: #{tpu_custom_call.1} parent=1 // pred_fallthru
      _
    // Predicated region
    $region18: #{tpu_custom_call.1} parent=1 // pred_check
      _
    $region19: #{tpu_custom_call.1} parent=1 // pred_check_branch
      %129 = sbr.rel (0) target = $region21
    $region20: #{tpu_custom_call.1} parent=1 // pred_region
      %130 = dma.done [#allocation4], 128
    $region21: #{tpu_custom_call.1} parent=1 // pred_fallthru
      _
    %131 = vsyncpa [#allocation3], 1
    %132 = vsyncpa [#allocation4], 1

// kernel: tpu_custom_call.1
$region0: #{tpu_custom_call.1}
  #allocation0 [shape = 'u32[]', space=smem, size = 0x4, offset = 0x4, fixed_abs, tag = 'smem constant byte address 0x4 - core index']
  #allocation1 [shape = 'u32[144,128]{1,0:T(1,128)}', space=vmem, size = 0x12000, scoped, tag = 'internal scratch']
  %s0 = inlined_call_operand.vmem [shape: s32[8,1], index: 0, kind: input, shape index: {}]
  %s1 = inlined_call_operand.hbm [shape: f32[64,128], index: 1, kind: input, shape index: {}]
  %s2 = inlined_call_operand.hbm [shape: f32[8,128], index: 2, kind: output, shape index: {}]
  %s3 = sld [smem:[#allocation0]]
  $region22: #{tpu_custom_call.1} parent=0
    _
  %s5 = ssub.s32 1, %s3
  %s6 = scalar_select 0, %s5, %s3
  $region1: #{tpu_custom_call.1} parent=0
    #allocation2 [shape = 'u8[32768]{0}', space=vmem, size = 0x8000, scoped, tag = 'input window, operand 1, single buffered']
    #allocation3 [shape = 's32[1]{0}', space=sflag, size = 0x4, scoped, tag = 'scoped memory for tpu_custom_call.1']
    #allocation4 [shape = 's32[1]{0}', space=sflag, size = 0x4, scoped, tag = 'scoped memory for tpu_custom_call.1']
    #allocation5 [shape = 'u8[4096]{0}', space=vmem, size = 0x1000, scoped, tag = 'output window, operand 0, single buffered']
    %7 = vsyncpa [#allocation3], 0
    %8 = vsyncpa [#allocation4], 0
    // Predicated region
    $region2: #{tpu_custom_call.1} parent=1 // pred_check
      _
    $region3: #{tpu_custom_call.1} parent=1 // pred_check_branch
      %10 = sbr.rel (0) target = $region5
    $region4: #{tpu_custom_call.1} parent=1 // pred_region
      _
    $region5: #{tpu_custom_call.1} parent=1 // pred_fallthru
      _
    // Predicated region
    $region6: #{tpu_custom_call.1} parent=1 // pred_check
      _
    $region7: #{tpu_custom_call.1} parent=1 // pred_check_branch
      %12 = sbr.rel (0) target = $region9
    $region8: #{tpu_custom_call.1} parent=1 // pred_region
      %s14 = ssub.s32 1024, 1024
      %15 = vsyncadd [#allocation3], %s14
      %s16 = sshll.u32 [#allocation2], 4
      %s17 = int_to_ptr.vmem [resolvable:$true] %s16
      %22 = dma.hbm_to_vmem [thread:$0]  %s1, 1024, %s17, [#allocation3], 128, 128, 8
    $region9: #{tpu_custom_call.1} parent=1 // pred_fallthru
      _
    // Predicated region
    $region10: #{tpu_custom_call.1} parent=1 // pred_check
      _
    $region11: #{tpu_custom_call.1} parent=1 // pred_check_branch
      %24 = sbr.rel (0) target = $region13
    $region12: #{tpu_custom_call.1} parent=1 // pred_region
      %25 = dma.done [#allocation3], 1024
    $region13: #{tpu_custom_call.1} parent=1 // pred_fallthru
      _
    %v26 = vld [vmem:[%s0] sm:$0xff]
    %v27 = vlaneseq
    %v28 = vand.u32 %v27, 127
    %29 = vset.pattern.permute.xlu0 0
    %30 = vperm.xlu0 %29, %v26
    %v31 = vpop.permute.xlu0 %30
    %vm32 = vcmp.eq.s32.totalorder %v28, %v31
    %v33 = vsel %vm32, 1, 0
    %v34 = vcvt.s32.f32 %v33
    %v35 = vld [vmem:[#allocation2] sm:$0xff]
    %v36 = vld [vmem:[#allocation2 + $0x8] sm:$0xff]
    %v37 = vld [vmem:[#allocation2 + $0x10] sm:$0xff]
    %v38 = vld [vmem:[#allocation2 + $0x18] sm:$0xff]
    %v39 = vld [vmem:[#allocation2 + $0x20] sm:$0xff]
    %v40 = vld [vmem:[#allocation2 + $0x28] sm:$0xff]
    %v41 = vld [vmem:[#allocation2 + $0x30] sm:$0xff]
    %v42 = vld [vmem:[#allocation2 + $0x38] sm:$0xff]
    %vm43 = vcmask 523264
    %v45 = vsel %vm43, %v34, 0
    %47 = vmatprep.subr.mxu0 0.0
    %48 = vmatpush1.msra.mxu0 %v35
    %49 = vmatprep.subr.mxu0 0.0
    %50 = vmatpush1.msra.mxu0 %v36
    %51 = vmatprep.subr.mxu0 0.0
    %52 = vmatpush1.msra.mxu0 %v37
    %53 = vmatprep.subr.mxu0 0.0
    %54 = vmatpush1.msra.mxu0 %v38
    %55 = vmatprep.subr.mxu0 0.0
    %56 = vmatpush1.msra.mxu0 %v39
    %57 = vmatprep.subr.mxu0 0.0
    %58 = vmatpush1.msra.mxu0 %v40
    %59 = vmatprep.subr.mxu0 0.0
    %60 = vmatpush1.msra.mxu0 %v41
    %61 = vmatprep.subr.mxu0 0.0
    %62 = vmatpush1.msra.mxu0 %v42
    %63 = vmatprep.subr.mxu0 0.0
    %64 = vmatpush1.msra.mxu0 0.0
    %65 = vmatprep.subr.mxu0 0.0
    %66 = vmatpush1.msra.mxu0 0.0
    %67 = vmatprep.subr.mxu0 0.0
    %68 = vmatpush1.msra.mxu0 0.0
    %69 = vmatprep.subr.mxu0 0.0
    %70 = vmatpush1.msra.mxu0 0.0
    %71 = vmatprep.subr.mxu0 0.0
    %72 = vmatpush1.msra.mxu0 0.0
    %73 = vmatprep.subr.mxu0 0.0
    %74 = vmatpush1.msra.mxu0 0.0
    %75 = vmatprep.subr.mxu0 0.0
    %76 = vmatpush1.msra.mxu0 0.0
    %77 = vmatprep.subr.mxu0 0.0
    %78 = vmatpush1.msra.mxu0 0.0
    %79 = vmatprep.subr.mxu0 0.0
    %80 = vmatpush1.msra.mxu0 0.0
    %81 = vmatprep.subr.mxu0 0.0
    %82 = vmatpush1.msra.mxu0 0.0
    %83 = vmatprep.subr.mxu0 0.0
    %84 = vmatpush1.msra.mxu0 0.0
    %85 = vmatprep.subr.mxu0 0.0
    %86 = vmatpush1.msra.mxu0 0.0
    %87 = vmatprep.subr.mxu0 0.0
    %88 = vmatpush1.msra.mxu0 0.0
    %89 = vmatprep.subr.mxu0 0.0
    %90 = vmatpush1.msra.mxu0 0.0
    %91 = vmatprep.subr.mxu0 0.0
    %92 = vmatpush1.msra.mxu0 0.0
    %93 = vmatprep.subr.mxu0 0.0
    %94 = vmatpush1.msra.mxu0 0.0
    %95 = vmatprep.subr.mxu0 0.0
    %96 = vmatpush1.msra.mxu0 0.0
    %97 = vmatprep.subr.mxu0 0.0
    %98 = vmatpush1.msra.mxu0 0.0
    %99 = vmatprep.subr.mxu0 0.0
    %100 = vmatpush1.msra.mxu0 0.0
    %101 = vmatprep.subr.mxu0 0.0
    %102 = vmatpush1.msra.mxu0 0.0
    %103 = vmatprep.subr.mxu0 0.0
    %104 = vmatpush1.msra.mxu0 0.0
    %105 = vmatprep.subr.mxu0 0.0
    %106 = vmatpush1.msra.mxu0 0.0
    %107 = vmatprep.subr.mxu0 0.0
    %108 = vmatpush1.msra.mxu0 0.0
    %109 = vmatprep.subr.mxu0 0.0
    %110 = vmatpush1.msra.mxu0 0.0
    %111 = vmatprep.mubr.f32.mxu0 0.0
    %112 = vmatmul.mubr.f32.gmra.mrb[0].mxu0 %v45
    %v113 = vpop.f32.mrb[0].mxu0
    %v114 = vadd.f32 0.0, %v113
    %v115 = vpop.f32.mrb[0].mxu0
    %116 = vdwg.mxu0
    %117 = vst [vmem:[#allocation5] sm:$0xff] %v114
    // Predicated region
    $region14: #{tpu_custom_call.1} parent=1 // pred_check
      _
    $region15: #{tpu_custom_call.1} parent=1 // pred_check_branch
      %119 = sbr.rel (0) target = $region17
    $region16: #{tpu_custom_call.1} parent=1 // pred_region
      %s121 = ssub.s32 128, 128
      %122 = vsyncadd [#allocation4], %s121
      %s124 = sshll.u32 [#allocation5], 4
      %s125 = int_to_ptr.vmem [resolvable:$true] %s124
      %127 = dma.vmem_to_hbm [thread:$0]  %s125, 128, %s2, [#allocation4]
    $region17: #{tpu_custom_call.1} parent=1 // pred_fallthru
      _
    // Predicated region
    $region18: #{tpu_custom_call.1} parent=1 // pred_check
      _
    $region19: #{tpu_custom_call.1} parent=1 // pred_check_branch
      %129 = sbr.rel (0) target = $region21
    $region20: #{tpu_custom_call.1} parent=1 // pred_region
      %130 = dma.done [#allocation4], 128
    $region21: #{tpu_custom_call.1} parent=1 // pred_fallthru
      _
    %131 = vsyncpa [#allocation3], 1
    %132 = vsyncpa [#allocation4], 1

</llo_original>
